<compile_context>
chip_gen: v7x
topology: tpu7x:2x2x1
jax: 0.10.0
libtpu: 0.0.40
codegen_flags: <defaults>
</compile_context>

<pallas_src>
import functools

import jax
import jax.numpy as jnp
from jax.experimental import pallas as pl
from jax.experimental.pallas import tpu as pltpu


def _polyloss_kernel(logits_ref, targets_ref, out_ref, *,
                     epsilon, label_smoothing, n_rows, tile_n):
    i = pl.program_id(0)

    x = logits_ref[...].astype(jnp.float32)        # (TILE_N, C), f32 compute
    t = targets_ref[...]                           # (TILE_N, 1) int32
    num_classes = x.shape[-1]

    # Numerically stable log-sum-exp along the class (lane) axis.
    m = jnp.max(x, axis=-1, keepdims=True)                                   # (TILE_N, 1)
    log_z = m + jnp.log(jnp.sum(jnp.exp(x - m), axis=-1, keepdims=True))     # (TILE_N, 1)

    # Target logit via masked select (cheaper than one-hot cast + multiply).
    col = jax.lax.broadcasted_iota(jnp.int32, x.shape, 1)
    target_logit = jnp.sum(jnp.where(col == t, x, 0.0), axis=-1, keepdims=True)  # (TILE_N, 1)
    target_logp = target_logit - log_z
    nll = -target_logp

    if label_smoothing != 0.0:
        # PyTorch: ce_i = (1-ls) * nll_i + ls * mean_c(-logp_c)
        # and mean_c(-logp_c) = log_z - mean_c(x_c)  (no logp materialization).
        mean_x = jnp.sum(x, axis=-1, keepdims=True) * (1.0 / num_classes)
        ce_i = (1.0 - label_smoothing) * nll + label_smoothing * (log_z - mean_x)
    else:
        ce_i = nll

    # softmax prob of the true class == exp(log-softmax at the target).
    pt_i = jnp.exp(target_logp)                                              # (TILE_N, 1)

    combined = ce_i + epsilon * (1.0 - pt_i)                                 # (TILE_N, 1)

    if n_rows % tile_n != 0:
        # Mask padded tail rows of the last (partial) tile out of the sum.
        # (jnp.where is a select, so garbage/NaN rows are dropped safely.)
        row = jax.lax.broadcasted_iota(jnp.int32, combined.shape, 0) + i * tile_n
        combined = jnp.where(row < n_rows, combined, 0.0)

    partial = jnp.sum(combined, axis=0, keepdims=True)                       # (1, 1)
    out_ref[...] = jnp.broadcast_to(partial, out_ref.shape)                  # (8, 128) full-width store


def _vmem_capacity_bytes():
    try:
        return int(pltpu.get_tpu_info().vmem_capacity_bytes)
    except Exception:
        return 64 * 1024 * 1024   # conservative (v7x has 64 MiB per TensorCore)


def poly_loss(outputs, targets, *, epsilon=2.0, label_smoothing=0.0, tile_n=None):
    """outputs: (N, C) float logits (bf16 preferred — the kernel is HBM-bound
    and streams the native dtype, casting to f32 per tile); targets: (N,) ints.
    """
    n, c = outputs.shape
    targets2d = targets.astype(jnp.int32).reshape(n, 1)
    itemsize = jnp.dtype(outputs.dtype).itemsize

    # Per-chip budgets: bigger blocks / higher scoped-VMEM limit on 128 MiB
    # parts (v5e/v6e); tighter on 64 MiB-per-TC v7x so double-buffered inputs
    # plus the in-kernel f32 temporaries never spill.
    vmem_cap = _vmem_capacity_bytes()
    if vmem_cap >= 96 * 1024 * 1024:
        block_budget = 4 * 1024 * 1024      # bytes of *input dtype* per logits block
        vmem_limit = 96 * 1024 * 1024
    else:
        block_budget = 2 * 1024 * 1024
        vmem_limit = 48 * 1024 * 1024

    sub = 16  # row multiple: keeps bf16 sublane packing layouts clean

    if tile_n is None:
        tile_n = block_budget // max(1, c * itemsize)
        tile_n = (tile_n // sub) * sub
        if tile_n < 8:
            tile_n = 8                      # huge-C fallback: minimum legal tile
    else:
        tile_n = max(8, (int(tile_n) // 8) * 8)

    if tile_n >= n:
        if n >= 4 * sub:
            # Don't collapse mid-size batches into one block: keep >= 4 balanced
            # tiles so the v7x megacore split has work on both TensorCores.
            tile_n = max(sub, (pl.cdiv(n, 4) // sub) * sub)
        else:
            tile_n = n                      # tiny batch: single full-extent block
    num_tiles = pl.cdiv(n, tile_n)

    kernel = functools.partial(
        _polyloss_kernel,
        epsilon=float(epsilon),
        label_smoothing=float(label_smoothing),
        n_rows=n,
        tile_n=tile_n,
    )

    partials = pl.pallas_call(
        kernel,
        grid=(num_tiles,),
        out_shape=jax.ShapeDtypeStruct((num_tiles, 8, 128), jnp.float32),
        in_specs=[
            pl.BlockSpec((tile_n, c), lambda i: (i, 0)),
            pl.BlockSpec((tile_n, 1), lambda i: (i, 0)),
        ],
        out_specs=pl.BlockSpec((None, 8, 128), lambda i: (i, 0, 0)),
        compiler_params=pltpu.CompilerParams(
            dimension_semantics=("parallel",),
            vmem_limit_bytes=vmem_limit,
        ),
    )(outputs, targets2d)

    # Each (8,128) block holds its tile's sum of (ce_i + eps*(1-pt_i)) broadcast
    # across all 1024 positions; sum everything (no strided-slice epilogue) and
    # divide by 1024*N for the mean.
    return jnp.sum(partials) / (1024.0 * n)


if __name__ == "__main__":
    key = jax.random.PRNGKey(0)
    k1, k2, k3, k4 = jax.random.split(key, 4)

    def ref_loss(logits, tgts, epsilon, ls):
        logits = logits.astype(jnp.float32)
        logp = jax.nn.log_softmax(logits, axis=1)
        oh = jax.nn.one_hot(tgts, logits.shape[1], dtype=jnp.float32)
        nll = -jnp.sum(oh * logp, axis=1)
        ce_i = (1.0 - ls) * nll + ls * jnp.mean(-logp, axis=1)
        ce = jnp.mean(ce_i)
        pt = jnp.sum(oh * jnp.exp(logp), axis=1)
        return jnp.mean(ce + epsilon * (1.0 - pt))

    # Case 1: default label_smoothing=0.0, forced small tile -> 4 grid steps with
    # a ragged final tile (exercises multi-tile grid + tail-row masking).
    N, C = 30, 16
    outputs = jax.random.normal(k1, (N, C), dtype=jnp.float32)
    targets = jax.random.randint(k2, (N,), 0, C, dtype=jnp.int32)

    loss1 = poly_loss(outputs, targets, epsilon=2.0, label_smoothing=0.0, tile_n=8)
    jax.block_until_ready(loss1)
    ref1 = ref_loss(outputs, targets, 2.0, 0.0)
    assert jnp.allclose(loss1, ref1, atol=1e-5, rtol=1e-5), (loss1, ref1)

    # Case 2: label-smoothing path, auto tile size (tiny batch -> single block).
    loss2 = poly_loss(outputs, targets, epsilon=2.0, label_smoothing=0.1)
    jax.block_until_ready(loss2)
    ref2 = ref_loss(outputs, targets, 2.0, 0.1)
    assert jnp.allclose(loss2, ref2, atol=1e-5, rtol=1e-5), (loss2, ref2)

    # Case 3: bf16 logits streamed natively, auto tile size -> >= 4 balanced
    # tiles (megacore split path), lane-dense class dim.
    N3, C3 = 96, 160
    outputs3 = jax.random.normal(k3, (N3, C3), dtype=jnp.float32).astype(jnp.bfloat16)
    targets3 = jax.random.randint(k4, (N3,), 0, C3, dtype=jnp.int32)

    loss3 = poly_loss(outputs3, targets3, epsilon=2.0, label_smoothing=0.05)
    jax.block_until_ready(loss3)
    ref3 = ref_loss(outputs3, targets3, 2.0, 0.05)   # ref also starts from bf16 values
    assert jnp.allclose(loss3, ref3, atol=1e-4, rtol=1e-4), (loss3, ref3)

    print("KERNEL_OK")
</pallas_src>

<mosaic_0001>
module attributes {stable_mosaic.version = 11 : i64} {
  func.func @_polyloss_kernel(%arg0: i32, %arg1: memref<8x16xf32, #tpu.memory_space<vmem>>, %arg2: memref<8x1xi32, #tpu.memory_space<vmem>>, %arg3: memref<1x8x128xf32, #tpu.memory_space<vmem>>) attributes {dimension_semantics = [#tpu.dimension_semantics<parallel>], iteration_bounds = array<i64: 4>, scalar_prefetch = 0 : i64, scratch_operands = 0 : i64, tpu.core_type = #tpu.core_type<tc>, window_params = [{transform_indices = @transform_0, window_bounds = array<i64: 8, 16>}, {transform_indices = @transform_1, window_bounds = array<i64: 8, 1>}, {transform_indices = @transform_2, window_bounds = array<i64: 1, 8, 128>}]} {
    %c0 = arith.constant 0 : index
    %c0_0 = arith.constant 0 : index
    %0 = vector.load %arg1[%c0, %c0_0] : memref<8x16xf32, #tpu.memory_space<vmem>>, vector<8x16xf32>
    %c0_1 = arith.constant 0 : index
    %c0_2 = arith.constant 0 : index
    %1 = vector.load %arg2[%c0_1, %c0_2] : memref<8x1xi32, #tpu.memory_space<vmem>>, vector<8x1xi32>
    %cst = arith.constant dense<0xFF800000> : vector<8xf32>
    %2 = vector.multi_reduction <maximumf>, %0, %cst [1] : vector<8x16xf32> to vector<8xf32>
    %3 = vector.shape_cast %2 : vector<8xf32> to vector<8x1xf32>
    %4 = vector.broadcast %3 : vector<8x1xf32> to vector<8x16xf32>
    %5 = arith.subf %0, %4 : vector<8x16xf32>
    %6 = math.exp %5 : vector<8x16xf32>
    %cst_3 = arith.constant dense<0.000000e+00> : vector<8xf32>
    %7 = vector.multi_reduction <add>, %6, %cst_3 [1] : vector<8x16xf32> to vector<8xf32>
    %8 = vector.shape_cast %7 : vector<8xf32> to vector<8x1xf32>
    %9 = math.log %8 : vector<8x1xf32>
    %10 = arith.addf %3, %9 : vector<8x1xf32>
    %11 = tpu.iota {dimensions = array<i32: 1>} : vector<8x16xi32>
    %12 = vector.broadcast %1 : vector<8x1xi32> to vector<8x16xi32>
    %13 = arith.cmpi eq, %11, %12 : vector<8x16xi32>
    %cst_4 = arith.constant 0.000000e+00 : f32
    %14 = vector.broadcast %cst_4 : f32 to vector<8x16xf32>
    %15 = arith.select %13, %0, %14 : vector<8x16xi1>, vector<8x16xf32>
    %cst_5 = arith.constant dense<0.000000e+00> : vector<8xf32>
    %16 = vector.multi_reduction <add>, %15, %cst_5 [1] : vector<8x16xf32> to vector<8xf32>
    %17 = vector.shape_cast %16 : vector<8xf32> to vector<8x1xf32>
    %18 = arith.subf %17, %10 : vector<8x1xf32>
    %cst_6 = arith.constant 0.000000e+00 : f32
    %19 = vector.broadcast %cst_6 : f32 to vector<8x1xf32>
    %20 = arith.subf %19, %18 : vector<8x1xf32>
    %21 = math.exp %18 : vector<8x1xf32>
    %cst_7 = arith.constant 1.000000e+00 : f32
    %22 = vector.broadcast %cst_7 : f32 to vector<8x1xf32>
    %23 = arith.subf %22, %21 : vector<8x1xf32>
    %cst_8 = arith.constant 2.000000e+00 : f32
    %24 = vector.broadcast %cst_8 : f32 to vector<8x1xf32>
    %25 = arith.mulf %24, %23 : vector<8x1xf32>
    %26 = arith.addf %20, %25 : vector<8x1xf32>
    %27 = tpu.iota {dimensions = array<i32: 0>} : vector<8x1xi32>
    %c8_i32 = arith.constant 8 : i32
    %28 = arith.muli %arg0, %c8_i32 : i32
    %29 = vector.broadcast %28 : i32 to vector<8x1xi32>
    %30 = arith.addi %27, %29 : vector<8x1xi32>
    %c30_i32 = arith.constant 30 : i32
    %31 = vector.broadcast %c30_i32 : i32 to vector<8x1xi32>
    %32 = arith.cmpi slt, %30, %31 : vector<8x1xi32>
    %cst_9 = arith.constant 0.000000e+00 : f32
    %33 = vector.broadcast %cst_9 : f32 to vector<8x1xf32>
    %34 = arith.select %32, %26, %33 : vector<8x1xi1>, vector<8x1xf32>
    %cst_10 = arith.constant dense<0.000000e+00> : vector<1xf32>
    %35 = vector.multi_reduction <add>, %34, %cst_10 [0] : vector<8x1xf32> to vector<1xf32>
    %36 = vector.shape_cast %35 : vector<1xf32> to vector<1x1xf32>
    %37 = vector.shape_cast %36 : vector<1x1xf32> to vector<1x1xf32>
    %38 = vector.broadcast %37 : vector<1x1xf32> to vector<8x128xf32>
    %c0_11 = arith.constant 0 : index
    %c0_12 = arith.constant 0 : index
    %c0_13 = arith.constant 0 : index
    %39 = vector.load %arg3[%c0_11, %c0_12, %c0_13] : memref<1x8x128xf32, #tpu.memory_space<vmem>>, vector<1x8x128xf32>
    %40 = vector.shape_cast %39 : vector<1x8x128xf32> to vector<8x128xf32>
    %41 = vector.shape_cast %38 : vector<8x128xf32> to vector<1x8x128xf32>
    tpu.vector_store %arg3[%c0_11, %c0_12, %c0_13], %41 {strides = array<i32>} : memref<1x8x128xf32, #tpu.memory_space<vmem>>, vector<1x8x128xf32>,
    return
  }
  func.func @transform_0(%arg0: i32) -> (i32, i32) {
    %c0_i32 = arith.constant 0 : i32
    %c0_i32_0 = arith.constant 0 : i32
    return %arg0, %c0_i32 : i32, i32
  }
  func.func @transform_1(%arg0: i32) -> (i32, i32) {
    %c0_i32 = arith.constant 0 : i32
    %c0_i32_0 = arith.constant 0 : i32
    return %arg0, %c0_i32 : i32, i32
  }
  func.func @transform_2(%arg0: i32) -> (i32, i32, i32) {
    %c0_i32 = arith.constant 0 : i32
    %c0_i32_0 = arith.constant 0 : i32
    %c0_i32_1 = arith.constant 0 : i32
    return %arg0, %c0_i32, %c0_i32_0 : i32, i32, i32
  }
}

</mosaic_0001>

<llo_original>
// kernel: tpu_custom_call.1
$region0: #{tpu_custom_call.1}
  #allocation0 [shape = 'u32[]', space=smem, size = 0x4, offset = 0x4, fixed_abs, tag = 'smem constant byte address 0x4 - core index']
  #allocation1 [shape = 'u32[144,128]{1,0:T(1,128)}', space=vmem, size = 0x12000, scoped, tag = 'internal scratch']
  %s0 = inlined_call_operand.vmem [shape: f32[30,16], index: 0, kind: input, shape index: {}]
  %s1 = inlined_call_operand.vmem [shape: s32[30,1], index: 1, kind: input, shape index: {}]
  %s2 = inlined_call_operand.hbm [shape: f32[4,8,128], index: 2, kind: output, shape index: {}]
  %s3 = sld [smem:[#allocation0]]
  $region41: #{tpu_custom_call.1} parent=0
    _
  %s5 = ssub.s32 1, %s3
  %s6 = scalar_select 0, %s5, %s3
  $region1: #{tpu_custom_call.1} parent=0
    #allocation2 [shape = 'u8[8192]{0}', space=vmem, size = 0x2000, scoped, tag = 'output window, operand 0']
    #allocation3 [shape = 's32[2]{0}', space=sflag, size = 0x8, scoped, tag = 'scoped memory for tpu_custom_call.1']
    %7 = vsyncpa [#allocation3], 0
    %s8 = scalar_lea.sflag [#allocation3], 1
    %9 = vsyncpa %s8, 0
    loop: start=0, step=1, limit=6
    $region2: #{tpu_custom_call.1} parent=1 // loop_pre_header
      _
    $region3: #{tpu_custom_call.1} parent=1 // loop_header
      %s11 = sphi 0, %s15
      %p12 = scmp.ge.s32.totalorder %s11, 6
      %s21 = sphi 0, %s23
      %s24 = sphi 0, %s21
      %s25 = sphi 0, %s24
      %s41 = sphi 0, %s25
      %s47 = sphi 0, %s49
      %s50 = sphi 0, %s47
      %s51 = sphi 0, %s50
      %s67 = sphi 0, %s51
      %s73 = sphi 0, %s75
      %s76 = sphi 0, %s73
      %s77 = sphi 0, %s76
      %s93 = sphi 0, %s77
    $region4: #{tpu_custom_call.1} parent=1 // loop_header_branch
      %14 = sbr.rel (%p12) target = $region8
    $region5: #{tpu_custom_call.1} parent=1 // loop_body
      %s16 = ssub.s32 %s11, 1
      %s17 = ssub.s32 %s11, 2
      %s18 = sadd.s32 %s11, 1
      %s19 = ssub.s32 %s11, %s18
      %p20 = scmp.eq.s32.totalorder %s19, 0
      %s22 = sadd.s32 %s21, 1
      %s23 = scalar_select %p20, %s21, %s22
      %p26 = pneg %p20
      %p27 = scmp.eq.s32.totalorder %s11, 3
      %p28 = por %p26, %p27
      %p29 = scmp.ne.s32.totalorder %s21, %s24
      %p30 = scmp.eq.s32.totalorder %s11, 0
      %p31 = por %p29, %p30
      %p32 = scmp.ne.s32.totalorder %s21, %s24
      %p33 = scmp.eq.s32.totalorder %s16, 3
      %p34 = por %p32, %p33
      %p35 = scmp.ne.s32.totalorder %s24, %s25
      %p36 = scmp.eq.s32.totalorder %s16, 0
      %p37 = por %p35, %p36
      %p38 = scmp.ne.s32.totalorder %s24, %s25
      %p39 = scmp.eq.s32.totalorder %s17, 3
      %p40 = por %p38, %p39
      %p42 = scmp.ne.s32.totalorder %s25, %s41
      %p43 = scmp.eq.s32.totalorder %s17, 0
      %p44 = por %p42, %p43
      %s45 = ssub.s32 %s11, %s18
      %p46 = scmp.eq.s32.totalorder %s45, 0
      %s48 = sadd.s32 %s47, 1
      %s49 = scalar_select %p46, %s47, %s48
      %p52 = pneg %p46
      %p53 = scmp.eq.s32.totalorder %s11, 3
      %p54 = por %p52, %p53
      %p55 = scmp.ne.s32.totalorder %s47, %s50
      %p56 = scmp.eq.s32.totalorder %s11, 0
      %p57 = por %p55, %p56
      %p58 = scmp.ne.s32.totalorder %s47, %s50
      %p59 = scmp.eq.s32.totalorder %s16, 3
      %p60 = por %p58, %p59
      %p61 = scmp.ne.s32.totalorder %s50, %s51
      %p62 = scmp.eq.s32.totalorder %s16, 0
      %p63 = por %p61, %p62
      %p64 = scmp.ne.s32.totalorder %s50, %s51
      %p65 = scmp.eq.s32.totalorder %s17, 3
      %p66 = por %p64, %p65
      %p68 = scmp.ne.s32.totalorder %s51, %s67
      %p69 = scmp.eq.s32.totalorder %s17, 0
      %p70 = por %p68, %p69
      %s71 = ssub.s32 %s11, %s18
      %p72 = scmp.eq.s32.totalorder %s71, 0
      %s74 = sadd.s32 %s73, 1
      %s75 = scalar_select %p72, %s73, %s74
      %p78 = pneg %p72
      %p79 = scmp.eq.s32.totalorder %s11, 3
      %p80 = por %p78, %p79
      %p81 = scmp.ne.s32.totalorder %s73, %s76
      %p82 = scmp.eq.s32.totalorder %s11, 0
      %p83 = por %p81, %p82
      %p84 = scmp.ne.s32.totalorder %s73, %s76
      %p85 = scmp.eq.s32.totalorder %s16, 3
      %p86 = por %p84, %p85
      %p87 = scmp.ne.s32.totalorder %s76, %s77
      %p88 = scmp.eq.s32.totalorder %s16, 0
      %p89 = por %p87, %p88
      %p90 = scmp.ne.s32.totalorder %s76, %s77
      %p91 = scmp.eq.s32.totalorder %s17, 3
      %p92 = por %p90, %p91
      %p94 = scmp.ne.s32.totalorder %s77, %s93
      %p95 = scmp.eq.s32.totalorder %s17, 0
      %p96 = por %p94, %p95
      %p97 = scmp.le.s32.totalorder 1, %s11
      %p98 = scmp.lt.s32.totalorder %s11, 5
      %p99 = pnand %p97, %p98
      %p100 = pneg %p99
      // Predicated region
      $region9: #{tpu_custom_call.1} parent=5 // pred_check
        _
      $region10: #{tpu_custom_call.1} parent=5 // pred_check_branch
        %102 = sbr.rel (%p99) target = $region12
      $region11: #{tpu_custom_call.1} parent=5 // pred_region
        %s103 = ssub.s32 %s11, 1
      $region12: #{tpu_custom_call.1} parent=5 // pred_fallthru
        _
      %p104 = scmp.lt.s32.totalorder %s11, 4
      // Predicated region
      $region13: #{tpu_custom_call.1} parent=5 // pred_check
        %p105 = pneg %p104
      $region14: #{tpu_custom_call.1} parent=5 // pred_check_branch
        %107 = sbr.rel (%p105) target = $region16
      $region15: #{tpu_custom_call.1} parent=5 // pred_region
        // Predicated region
        $region17: #{tpu_custom_call.1} parent=15 // pred_check
          %p108 = pneg %p31
        $region18: #{tpu_custom_call.1} parent=15 // pred_check_branch
          %110 = sbr.rel (%p108) target = $region20
        $region19: #{tpu_custom_call.1} parent=15 // pred_region
          %p111 = scmp.lt.s32.totalorder %s11, 3
          %s112 = scalar_select %p111, %s11, 3
          %s113 = smul.addr %s112, 8
          %s114 = scalar_lea.vmem %s0, %s113
        $region20: #{tpu_custom_call.1} parent=15 // pred_fallthru
          _
        // Predicated region
        $region21: #{tpu_custom_call.1} parent=15 // pred_check
          %p115 = pneg %p57
        $region22: #{tpu_custom_call.1} parent=15 // pred_check_branch
          %117 = sbr.rel (%p115) target = $region24
        $region23: #{tpu_custom_call.1} parent=15 // pred_region
          %p118 = scmp.lt.s32.totalorder %s11, 3
          %s119 = scalar_select %p118, %s11, 3
          %s120 = smul.addr %s119, 8
          %s121 = scalar_lea.vmem %s1, %s120
        $region24: #{tpu_custom_call.1} parent=15 // pred_fallthru
          _
      $region16: #{tpu_custom_call.1} parent=5 // pred_fallthru
        _
      %p122 = scmp.le.s32.totalorder 1, %s11
      %p123 = scmp.lt.s32.totalorder %s11, 5
      %p124 = pnand %p122, %p123
      %p125 = pneg %p124
      // Predicated region
      $region25: #{tpu_custom_call.1} parent=5 // pred_check
        _
      $region26: #{tpu_custom_call.1} parent=5 // pred_check_branch
        %127 = sbr.rel (%p124) target = $region28
      $region27: #{tpu_custom_call.1} parent=5 // pred_region
        %s128 = ssub.s32 %s11, 1
        %p129 = scmp.lt.s32.totalorder %s16, 3
        %s130 = scalar_select %p129, %s16, 3
        %s131 = smul.addr %s130, 8
        %s132 = scalar_lea.vmem %s0, %s131
        %p133 = pneg %p37
        %p134 = pneg %p34
        %p135 = scmp.lt.s32.totalorder %s16, 3
        %s136 = scalar_select %p135, %s16, 3
        %s137 = smul.addr %s136, 8
        %s138 = scalar_lea.vmem %s1, %s137
        %p139 = pneg %p63
        %p140 = pneg %p60
        %p141 = pneg %p89
        %p142 = pneg %p86
        %s143 = sand.u32 %s76, 1
        %s144 = scalar_lea.sflag [#allocation3], %s143
        %s145 = sand.u32 %s76, 1
        %s146 = smul.addr %s145, 8
        %s147 = scalar_lea.vmem [#allocation2], %s146
        %p148 = scmp.lt.s32.totalorder %s16, 3
        %s149 = scalar_select %p148, %s16, 3
        %s150 = smul.addr %s149, 8
        %s151 = scalar_lea.vmem %s0, %s150
        %p152 = scmp.lt.s32.totalorder %s16, 3
        %s153 = scalar_select %p152, %s16, 3
        %s154 = smul.addr %s153, 8
        %s155 = scalar_lea.vmem %s1, %s154
        %v156 = vld [vmem:[%s151] sm:$0xff]
        %v157 = vld [vmem:[%s155] sm:$0xff]
        %vm158 = vcmask 130048
        %v159 = vsel %vm158, %v156, -inf
        %160 = vmax.xlane.f32.xlu0 %v159
        %v161 = vpop.xlane.xlu0 %160
        %v162 = vsub.f32 %v156, %v161
        %v163 = vmul.f32 %v162, 1.442695
        %v164 = vpow.pop %v163
        %v165 = vsel %vm158, %v164, 0.0
        %166 = vadd.xlane.f32.xlu0 %v165
        %v167 = vpop.xlane.xlu0 %166
        %v168 = vlog2.pop %v167
        %v169 = vmul.f32 %v168, 0.6931472
        %v170 = vadd.f32 %v161, %v169
        %v171 = vlaneseq
        %v172 = vand.u32 %v171, 127
        %173 = vset.pattern.permute.xlu0 0
        %174 = vperm.xlu0 %173, %v157
        %v175 = vpop.permute.xlu0 %174
        %vm176 = vcmp.eq.s32.totalorder %v172, %v175
        %v177 = vsel %vm176, %v156, 0.0
        %v178 = vsel %vm158, %v177, 0.0
        %179 = vadd.xlane.f32.xlu0 %v178
        %v180 = vpop.xlane.xlu0 %179
        %v181 = vsub.f32 %v180, %v170
        %v182 = vsub.f32 0.0, %v181
        %v183 = vmul.f32 %v181, 1.442695
        %v184 = vpow.pop %v183
        %v185 = vsub.f32 1.0, %v184
        %v186 = vmul.f32 %v185, 2.0
        %v187 = vadd.f32 %v182, %v186
        %v188 = vlaneseq
        %v189 = vshrl.u32 %v188, 7
        %s190 = smul.u32 %s16, 8
        %v191 = vstv %s190
        %v192 = vadd.s32 %v189, %v191
        %vm193 = vcmp.lt.s32.totalorder %v192, 30
        %v194 = vsel %vm193, %v187, 0.0
        %v195 = vrot.slane %v194, 4
        %v196 = vadd.f32 %v194, %v195
        %v197 = vrot.slane %v196, 2
        %v198 = vadd.f32 %v196, %v197
        %v199 = vrot.slane %v198, 1
        %v200 = vadd.f32 %v198, %v199
        %201 = vst [vmem:[%s147] sm:$0xff] %v200
        %s202 = sand.u32 %s76, 1
        %s203 = scalar_lea.sflag [#allocation3], %s202
        %s204 = sand.u32 %s76, 1
        %s205 = smul.addr %s204, 8
        %s206 = scalar_lea.vmem [#allocation2], %s205
        // Predicated region
        $region29: #{tpu_custom_call.1} parent=27 // pred_check
          %p207 = pneg %p86
        $region30: #{tpu_custom_call.1} parent=27 // pred_check_branch
          %209 = sbr.rel (%p207) target = $region32
        $region31: #{tpu_custom_call.1} parent=27 // pred_region
          %s211 = ssub.s32 128, 128
          %212 = vsyncadd %s203, %s211
          %s213 = smul.addr %s16, 128
          %s214 = scalar_lea.hbm %s2, %s213
          %s216 = sshll.u32 %s206, 4
          %s217 = int_to_ptr.vmem [resolvable:$true] %s216
          %219 = dma.vmem_to_hbm [thread:$0]  %s217, 128, %s214, %s203
        $region32: #{tpu_custom_call.1} parent=27 // pred_fallthru
          _
      $region28: #{tpu_custom_call.1} parent=5 // pred_fallthru
        _
      %p220 = scmp.le.s32.totalorder 2, %s11
      // Predicated region
      $region33: #{tpu_custom_call.1} parent=5 // pred_check
        %p221 = pneg %p220
      $region34: #{tpu_custom_call.1} parent=5 // pred_check_branch
        %223 = sbr.rel (%p221) target = $region36
      $region35: #{tpu_custom_call.1} parent=5 // pred_region
        %s224 = ssub.s32 %s11, 2
        // Predicated region
        $region37: #{tpu_custom_call.1} parent=35 // pred_check
          %p225 = pneg %p92
        $region38: #{tpu_custom_call.1} parent=35 // pred_check_branch
          %227 = sbr.rel (%p225) target = $region40
        $region39: #{tpu_custom_call.1} parent=35 // pred_region
          %s228 = sand.u32 %s77, 1
          %s229 = scalar_lea.sflag [#allocation3], %s228
          %s230 = sand.u32 %s77, 1
          %s231 = smul.addr %s230, 8
          %s232 = scalar_lea.vmem [#allocation2], %s231
          %233 = dma.done %s229, 128
        $region40: #{tpu_custom_call.1} parent=35 // pred_fallthru
          _
      $region36: #{tpu_custom_call.1} parent=5 // pred_fallthru
        _
    $region6: #{tpu_custom_call.1} parent=1 // loop_footer
      %s15 = sadd.s32 1, %s11
    $region7: #{tpu_custom_call.1} parent=1 // loop_footer_branch
      %10 = sbr.rel target = $region3
    $region8: #{tpu_custom_call.1} parent=1 // loop_exit
      _
    %234 = vsyncpa [#allocation3], 1
    %s235 = scalar_lea.sflag [#allocation3], 1
    %236 = vsyncpa %s235, 1

</llo_original>
